<compile_context>
chip_gen: v6e
topology: v6e:2x2x1
jax: 0.10.0
libtpu: 0.0.40
codegen_flags: <defaults>
</compile_context>

<pallas_src>
import functools

import jax
import jax.numpy as jnp
from jax.experimental import pallas as pl
from jax.experimental.pallas import tpu as pltpu

_TAU = 7.0
_THRESH = 1.0
_VMEM = pl.BlockSpec(memory_space=pltpu.MemorySpace.VMEM)


def _layer_update(w_t, v_row, i_row, p_row, *, w_sign, s_prime, s_big):
    """One membrane-potential + firing-rate update, all (1, N) row layout.

    w_t   : (N, N)  transposed connectivity (H0^T or W0^T)
    v_row : (1, N)  presynaptic firing rates
    i_row : (1, N)  external input
    p_row : (1, N)  current membrane potential
    """
    # (W @ v)^T == v_row @ W^T : lands on the MXU, result already lane-dense.
    wv = jnp.dot(v_row, w_t, preferred_element_type=jnp.float32)      # (1, N)
    # Mitral (w_sign=-1): p - 2*(Hv + p/tau - I) == p + 2*(-Hv - p/tau + I)
    # Granule(w_sign=+1): p + 2*(Wv - p/tau + I)
    new_p = p_row + 2.0 * (w_sign * wv - p_row / _TAU + i_row)
    # Single tanh: pick the scale first (identical to the two-branch form).
    s_sel = jnp.where(new_p < _THRESH, s_prime, s_big)
    fr = s_prime + s_sel * jnp.tanh((new_p - _THRESH) / s_sel)
    return new_p, fr


def _neuron_layer_kernel(w_t_ref, v_ref, i_ref, p_ref, pot_out_ref, fr_ref,
                         *, w_sign, s_prime, s_big):
    """Single Neuron_Layer forward step (module-equivalent kernel)."""
    new_p, fr = _layer_update(w_t_ref[...], v_ref[...], i_ref[...], p_ref[...],
                              w_sign=w_sign, s_prime=s_prime, s_big=s_big)
    pot_out_ref[...] = new_p
    fr_ref[...] = fr


def _fused_bulb_kernel(h0_t_ref, w0_t_ref, odor_ref, ic_ref,
                       pm_ref, pg_ref, vg_ref, vm_ref,
                       pm_out, frm_out, pg_out, frg_out):
    """Both layers of one olfactory-bulb step fused into a single call."""
    new_pm, frm = _layer_update(h0_t_ref[...], vg_ref[...], odor_ref[...],
                                pm_ref[...], w_sign=-1.0, s_prime=0.14, s_big=1.4)
    new_pg, frg = _layer_update(w0_t_ref[...], vm_ref[...], ic_ref[...],
                                pg_ref[...], w_sign=1.0, s_prime=0.29, s_big=2.9)
    pm_out[...] = new_pm
    frm_out[...] = frm
    pg_out[...] = new_pg
    frg_out[...] = frg


def neuron_layer_forward(cell_type, weight_t, potential, ext_input, presyn_rate):
    """Pallas equivalent of Neuron_Layer.forward([ext_input, presyn_rate]).

    `weight_t` is the TRANSPOSED connectivity (hoist the transpose/cast out of
    any time loop).  Other args accept (N,), (N,1) or (1,N); returns (N,1)
    column vectors matching the torch layout.
    """
    n = weight_t.shape[0]
    if cell_type == "Mitral":
        w_sign, s_prime, s_big = -1.0, 0.14, 1.4
    elif cell_type == "Granule":
        w_sign, s_prime, s_big = 1.0, 0.29, 2.9
    else:
        raise ValueError(f"unknown cell type {cell_type!r}")

    p_row = jnp.asarray(potential, jnp.float32).reshape(1, n)
    i_row = jnp.asarray(ext_input, jnp.float32).reshape(1, n)
    v_row = jnp.asarray(presyn_rate, jnp.float32).reshape(1, n)

    kernel = functools.partial(_neuron_layer_kernel,
                               w_sign=w_sign, s_prime=s_prime, s_big=s_big)
    new_pot, fire_rate = pl.pallas_call(
        kernel,
        out_shape=(
            jax.ShapeDtypeStruct((1, n), jnp.float32),   # membrane potential
            jax.ShapeDtypeStruct((1, n), jnp.float32),   # firing rate
        ),
        in_specs=[_VMEM, _VMEM, _VMEM, _VMEM],
        out_specs=(_VMEM, _VMEM),
    )(weight_t, v_row, i_row, p_row)
    return new_pot.reshape(n, 1), fire_rate.reshape(n, 1)


def bulb_step(h0_t, w0_t, odor_row, ic_row, pot_m_row, pot_g_row,
              v_gran_row, v_mit_row):
    """One fused olfactory-bulb step: Mitral + Granule updates in one call.

    All operands must already be float32 rows / transposed weights (hoist the
    layout glue out of the time loop).  Returns (1, N) rows.
    """
    n = h0_t.shape[0]
    out = pl.pallas_call(
        _fused_bulb_kernel,
        out_shape=(
            jax.ShapeDtypeStruct((1, n), jnp.float32),   # mitral potential
            jax.ShapeDtypeStruct((1, n), jnp.float32),   # mitral firing rate
            jax.ShapeDtypeStruct((1, n), jnp.float32),   # granule potential
            jax.ShapeDtypeStruct((1, n), jnp.float32),   # granule firing rate
        ),
        in_specs=[_VMEM] * 8,
        out_specs=(_VMEM, _VMEM, _VMEM, _VMEM),
    )(h0_t, w0_t, odor_row, ic_row, pot_m_row, pot_g_row, v_gran_row, v_mit_row)
    return out


def _reference(cell_type, weight, potential, ext_input, presyn_rate):
    """Pure-JAX reference mirroring the PyTorch code (for correctness check)."""
    if cell_type == "Mitral":
        sp, sb = 0.14, 1.4
        p = potential - 2.0 * (weight @ presyn_rate + potential / 7.0 - ext_input)
    else:
        sp, sb = 0.29, 2.9
        p = potential + 2.0 * (weight @ presyn_rate - potential / 7.0 + ext_input)
    fr = jnp.where(p < 1.0,
                   sp + sp * jnp.tanh((p - 1.0) / sp),
                   sp + sb * jnp.tanh((p - 1.0) / sb))
    return p, fr


if __name__ == "__main__":
    N = 10  # cell_count in the original script

    # Deterministic parameter init, straight from MembranePotential.__init__.
    H0 = jnp.array(
        [[0.3, 0.9, 0, 0, 0, 0, 0, 0, 0, 0.7],
         [0.9, 0.4, 1.0, 0, 0, 0, 0, 0, 0, 0],
         [0, 0.8, 0.3, 0.8, 0, 0, 0, 0, 0, 0],
         [0, 0, 0.7, 0.5, 0.9, 0, 0, 0, 0, 0],
         [0, 0, 0, 0.8, 0.3, 0.3, 0, 0, 0, 0],
         [0, 0, 0, 0, 0.7, 0.3, 0.9, 0, 0, 0],
         [0, 0, 0, 0, 0, 0.7, 0.4, 0.9, 0, 0],
         [0, 0, 0, 0, 0, 0, 0.5, 0.5, 0.7, 0],
         [0, 0, 0, 0, 0, 0, 0, 0.9, 0.3, 0.9],
         [0.7, 0, 0, 0, 0, 0, 0, 0, 0.8, 0.3]], jnp.float32)
    W0 = jnp.array(
        [[0.3, 0.7, 0, 0, 0, 0, 0, 0, 0.5, 0.3],
         [0.3, 0.2, 0.5, 0, 0, 0, 0, 0, 0, 0.7],
         [0, 0.1, 0.3, 0.5, 0, 0, 0, 0, 0, 0],
         [0, 0.5, 0.2, 0.2, 0.5, 0, 0, 0, 0, 0],
         [0.5, 0, 0, 0.5, 0.1, 0.9, 0, 0, 0, 0],
         [0, 0, 0, 0, 0.3, 0.3, 0.5, 0.4, 0, 0],
         [0, 0, 0, 0.6, 0, 0.2, 0.3, 0.5, 0, 0],
         [0, 0, 0, 0, 0, 0, 0.5, 0.3, 0.5, 0],
         [0, 0, 0, 0, 0, 0.2, 0, 0.2, 0.3, 0.7],
         [0.7, 0, 0, 0, 0, 0, 0, 0.2, 0.3, 0.5]], jnp.float32)

    # Hoisted layout glue: transposed weights, row-layout constants (done once).
    H0_T = jnp.transpose(H0)
    W0_T = jnp.transpose(W0)

    # Odor pattern from the original script (input[0] for the mitral layer).
    odor = jnp.array(
        [0.002, 0.001, 0.001, 0, 0.00152, 0.00152, 0.0001, 0, 0.003, 0.0003],
        jnp.float32)
    odor_row = odor.reshape(1, N)
    # Constant centrifugal input for granule cells (I_c = 0.1 per docstring).
    ic_row = jnp.full((1, N), 0.1, jnp.float32)

    # Deterministic synthetic presynaptic firing rates.
    key = jax.random.PRNGKey(0)
    k1, k2 = jax.random.split(key)
    v_granule_row = jax.random.uniform(k1, (1, N), jnp.float32)  # granule -> mitral
    v_mitral_row = jax.random.uniform(k2, (1, N), jnp.float32)   # mitral -> granule

    # Initial membrane potential: torch.ones(cell_count, 1) * 0.3
    pot0_row = jnp.full((1, N), 0.3, jnp.float32)

    # --- Fused path: both layers, one pallas_call -------------------------
    m_pot_r, m_fr_r, g_pot_r, g_fr_r = bulb_step(
        H0_T, W0_T, odor_row, ic_row, pot0_row, pot0_row,
        v_granule_row, v_mitral_row)

    # --- Per-layer path (exact module-equivalent forward) -----------------
    m_pot, m_fr = neuron_layer_forward("Mitral", H0_T, pot0_row, odor_row,
                                       v_granule_row)
    g_pot, g_fr = neuron_layer_forward("Granule", W0_T, pot0_row, ic_row,
                                       v_mitral_row)

    jax.block_until_ready((m_pot_r, m_fr_r, g_pot_r, g_fr_r,
                           m_pot, m_fr, g_pot, g_fr))

    # Correctness check against a pure-JAX reference of the PyTorch math.
    pot0_col = pot0_row.reshape(N, 1)
    rm_pot, rm_fr = _reference("Mitral", H0, pot0_col, odor.reshape(N, 1),
                               v_granule_row.reshape(N, 1))
    rg_pot, rg_fr = _reference("Granule", W0, pot0_col, ic_row.reshape(N, 1),
                               v_mitral_row.reshape(N, 1))

    assert jnp.allclose(m_pot, rm_pot, atol=1e-5), "mitral potential mismatch"
    assert jnp.allclose(m_fr, rm_fr, atol=1e-5), "mitral firing-rate mismatch"
    assert jnp.allclose(g_pot, rg_pot, atol=1e-5), "granule potential mismatch"
    assert jnp.allclose(g_fr, rg_fr, atol=1e-5), "granule firing-rate mismatch"

    assert jnp.allclose(m_pot_r.reshape(N, 1), rm_pot, atol=1e-5), \
        "fused mitral potential mismatch"
    assert jnp.allclose(m_fr_r.reshape(N, 1), rm_fr, atol=1e-5), \
        "fused mitral firing-rate mismatch"
    assert jnp.allclose(g_pot_r.reshape(N, 1), rg_pot, atol=1e-5), \
        "fused granule potential mismatch"
    assert jnp.allclose(g_fr_r.reshape(N, 1), rg_fr, atol=1e-5), \
        "fused granule firing-rate mismatch"

    print("KERNEL_OK")
</pallas_src>

<mosaic_0001>
module attributes {stable_mosaic.version = 11 : i64} {
  func.func @_fused_bulb_kernel(%arg0: memref<10x10xf32, #tpu.memory_space<vmem>>, %arg1: memref<10x10xf32, #tpu.memory_space<vmem>>, %arg2: memref<1x10xf32, #tpu.memory_space<vmem>>, %arg3: memref<1x10xf32, #tpu.memory_space<vmem>>, %arg4: memref<1x10xf32, #tpu.memory_space<vmem>>, %arg5: memref<1x10xf32, #tpu.memory_space<vmem>>, %arg6: memref<1x10xf32, #tpu.memory_space<vmem>>, %arg7: memref<1x10xf32, #tpu.memory_space<vmem>>, %arg8: memref<1x10xf32, #tpu.memory_space<vmem>>, %arg9: memref<1x10xf32, #tpu.memory_space<vmem>>, %arg10: memref<1x10xf32, #tpu.memory_space<vmem>>, %arg11: memref<1x10xf32, #tpu.memory_space<vmem>>) attributes {dimension_semantics = [], scalar_prefetch = 0 : i64, scratch_operands = 0 : i64, tpu.core_type = #tpu.core_type<tc>} {
    %c0 = arith.constant 0 : index
    %c0_0 = arith.constant 0 : index
    %0 = vector.load %arg0[%c0, %c0_0] : memref<10x10xf32, #tpu.memory_space<vmem>>, vector<10x10xf32>
    %c0_1 = arith.constant 0 : index
    %c0_2 = arith.constant 0 : index
    %1 = vector.load %arg6[%c0_1, %c0_2] : memref<1x10xf32, #tpu.memory_space<vmem>>, vector<1x10xf32>
    %c0_3 = arith.constant 0 : index
    %c0_4 = arith.constant 0 : index
    %2 = vector.load %arg2[%c0_3, %c0_4] : memref<1x10xf32, #tpu.memory_space<vmem>>, vector<1x10xf32>
    %c0_5 = arith.constant 0 : index
    %c0_6 = arith.constant 0 : index
    %3 = vector.load %arg4[%c0_5, %c0_6] : memref<1x10xf32, #tpu.memory_space<vmem>>, vector<1x10xf32>
    %cst = arith.constant dense<0.000000e+00> : vector<1x10xf32>
    %4 = tpu.matmul %1, %0, %cst {dimension_numbers = #tpu.dot_dimension_numbers<[1], [0], [0], [1], [0, 0, 1, 1], [], []>} : vector<1x10xf32>, vector<10x10xf32>, vector<1x10xf32> -> vector<1x10xf32>
    %cst_7 = arith.constant -1.000000e+00 : f32
    %5 = vector.broadcast %cst_7 : f32 to vector<1x10xf32>
    %6 = arith.mulf %5, %4 : vector<1x10xf32>
    %cst_8 = arith.constant 7.000000e+00 : f32
    %7 = vector.broadcast %cst_8 : f32 to vector<1x10xf32>
    %8 = arith.divf %3, %7 : vector<1x10xf32>
    %9 = arith.subf %6, %8 : vector<1x10xf32>
    %10 = arith.addf %9, %2 : vector<1x10xf32>
    %cst_9 = arith.constant 2.000000e+00 : f32
    %11 = vector.broadcast %cst_9 : f32 to vector<1x10xf32>
    %12 = arith.mulf %11, %10 : vector<1x10xf32>
    %13 = arith.addf %3, %12 : vector<1x10xf32>
    %cst_10 = arith.constant 1.000000e+00 : f32
    %14 = vector.broadcast %cst_10 : f32 to vector<1x10xf32>
    %15 = arith.cmpf olt, %13, %14 : vector<1x10xf32>
    %cst_11 = arith.constant 1.400000e-01 : f32
    %cst_12 = arith.constant 1.400000e+00 : f32
    %16 = vector.broadcast %cst_11 : f32 to vector<1x10xf32>
    %17 = vector.broadcast %cst_12 : f32 to vector<1x10xf32>
    %18 = arith.select %15, %16, %17 : vector<1x10xi1>, vector<1x10xf32>
    %cst_13 = arith.constant 1.000000e+00 : f32
    %19 = vector.broadcast %cst_13 : f32 to vector<1x10xf32>
    %20 = arith.subf %13, %19 : vector<1x10xf32>
    %21 = arith.divf %20, %18 : vector<1x10xf32>
    %22 = math.tanh %21 : vector<1x10xf32>
    %23 = arith.mulf %18, %22 : vector<1x10xf32>
    %cst_14 = arith.constant 1.400000e-01 : f32
    %24 = vector.broadcast %cst_14 : f32 to vector<1x10xf32>
    %25 = arith.addf %24, %23 : vector<1x10xf32>
    %c0_15 = arith.constant 0 : index
    %c0_16 = arith.constant 0 : index
    %26 = vector.load %arg1[%c0_15, %c0_16] : memref<10x10xf32, #tpu.memory_space<vmem>>, vector<10x10xf32>
    %c0_17 = arith.constant 0 : index
    %c0_18 = arith.constant 0 : index
    %27 = vector.load %arg7[%c0_17, %c0_18] : memref<1x10xf32, #tpu.memory_space<vmem>>, vector<1x10xf32>
    %c0_19 = arith.constant 0 : index
    %c0_20 = arith.constant 0 : index
    %28 = vector.load %arg3[%c0_19, %c0_20] : memref<1x10xf32, #tpu.memory_space<vmem>>, vector<1x10xf32>
    %c0_21 = arith.constant 0 : index
    %c0_22 = arith.constant 0 : index
    %29 = vector.load %arg5[%c0_21, %c0_22] : memref<1x10xf32, #tpu.memory_space<vmem>>, vector<1x10xf32>
    %cst_23 = arith.constant dense<0.000000e+00> : vector<1x10xf32>
    %30 = tpu.matmul %27, %26, %cst_23 {dimension_numbers = #tpu.dot_dimension_numbers<[1], [0], [0], [1], [0, 0, 1, 1], [], []>} : vector<1x10xf32>, vector<10x10xf32>, vector<1x10xf32> -> vector<1x10xf32>
    %cst_24 = arith.constant 1.000000e+00 : f32
    %31 = vector.broadcast %cst_24 : f32 to vector<1x10xf32>
    %32 = arith.mulf %31, %30 : vector<1x10xf32>
    %cst_25 = arith.constant 7.000000e+00 : f32
    %33 = vector.broadcast %cst_25 : f32 to vector<1x10xf32>
    %34 = arith.divf %29, %33 : vector<1x10xf32>
    %35 = arith.subf %32, %34 : vector<1x10xf32>
    %36 = arith.addf %35, %28 : vector<1x10xf32>
    %cst_26 = arith.constant 2.000000e+00 : f32
    %37 = vector.broadcast %cst_26 : f32 to vector<1x10xf32>
    %38 = arith.mulf %37, %36 : vector<1x10xf32>
    %39 = arith.addf %29, %38 : vector<1x10xf32>
    %cst_27 = arith.constant 1.000000e+00 : f32
    %40 = vector.broadcast %cst_27 : f32 to vector<1x10xf32>
    %41 = arith.cmpf olt, %39, %40 : vector<1x10xf32>
    %cst_28 = arith.constant 2.900000e-01 : f32
    %cst_29 = arith.constant 2.900000e+00 : f32
    %42 = vector.broadcast %cst_28 : f32 to vector<1x10xf32>
    %43 = vector.broadcast %cst_29 : f32 to vector<1x10xf32>
    %44 = arith.select %41, %42, %43 : vector<1x10xi1>, vector<1x10xf32>
    %cst_30 = arith.constant 1.000000e+00 : f32
    %45 = vector.broadcast %cst_30 : f32 to vector<1x10xf32>
    %46 = arith.subf %39, %45 : vector<1x10xf32>
    %47 = arith.divf %46, %44 : vector<1x10xf32>
    %48 = math.tanh %47 : vector<1x10xf32>
    %49 = arith.mulf %44, %48 : vector<1x10xf32>
    %cst_31 = arith.constant 2.900000e-01 : f32
    %50 = vector.broadcast %cst_31 : f32 to vector<1x10xf32>
    %51 = arith.addf %50, %49 : vector<1x10xf32>
    %c0_32 = arith.constant 0 : index
    %c0_33 = arith.constant 0 : index
    %52 = vector.load %arg8[%c0_32, %c0_33] : memref<1x10xf32, #tpu.memory_space<vmem>>, vector<1x10xf32>
    tpu.vector_store %arg8[%c0_32, %c0_33], %13 {strides = array<i32>} : memref<1x10xf32, #tpu.memory_space<vmem>>, vector<1x10xf32>,
    %c0_34 = arith.constant 0 : index
    %c0_35 = arith.constant 0 : index
    %53 = vector.load %arg9[%c0_34, %c0_35] : memref<1x10xf32, #tpu.memory_space<vmem>>, vector<1x10xf32>
    tpu.vector_store %arg9[%c0_34, %c0_35], %25 {strides = array<i32>} : memref<1x10xf32, #tpu.memory_space<vmem>>, vector<1x10xf32>,
    %c0_36 = arith.constant 0 : index
    %c0_37 = arith.constant 0 : index
    %54 = vector.load %arg10[%c0_36, %c0_37] : memref<1x10xf32, #tpu.memory_space<vmem>>, vector<1x10xf32>
    tpu.vector_store %arg10[%c0_36, %c0_37], %39 {strides = array<i32>} : memref<1x10xf32, #tpu.memory_space<vmem>>, vector<1x10xf32>,
    %c0_38 = arith.constant 0 : index
    %c0_39 = arith.constant 0 : index
    %55 = vector.load %arg11[%c0_38, %c0_39] : memref<1x10xf32, #tpu.memory_space<vmem>>, vector<1x10xf32>
    tpu.vector_store %arg11[%c0_38, %c0_39], %51 {strides = array<i32>} : memref<1x10xf32, #tpu.memory_space<vmem>>, vector<1x10xf32>,
    return
  }
}

</mosaic_0001>

<llo_original>
// kernel: tpu_custom_call.1
$region0: #{tpu_custom_call.1}
  #allocation0 [shape = 'u32[]', space=smem, size = 0x4, offset = 0x4, fixed_abs, tag = 'smem constant byte address 0x4 - core index']
  #allocation1 [shape = 'u32[144,128]{1,0:T(1,128)}', space=vmem, size = 0x12000, scoped, tag = 'internal scratch']
  %s0 = inlined_call_operand.hbm [shape: f32[10,10], index: 0, kind: input, shape index: {}]
  %s1 = inlined_call_operand.hbm [shape: f32[10,10], index: 1, kind: input, shape index: {}]
  %s2 = inlined_call_operand.vmem [shape: f32[1,10], index: 2, kind: input, shape index: {}]
  %s3 = inlined_call_operand.vmem [shape: f32[1,10], index: 3, kind: input, shape index: {}]
  %s4 = inlined_call_operand.vmem [shape: f32[1,10], index: 4, kind: input, shape index: {}]
  %s5 = inlined_call_operand.vmem [shape: f32[1,10], index: 5, kind: input, shape index: {}]
  %s6 = inlined_call_operand.vmem [shape: f32[1,10], index: 6, kind: input, shape index: {}]
  %s7 = inlined_call_operand.vmem [shape: f32[1,10], index: 7, kind: input, shape index: {}]
  %s8 = inlined_call_operand.hbm [shape: f32[1,10], index: 8, kind: output, shape index: {0}]
  %s9 = inlined_call_operand.hbm [shape: f32[1,10], index: 9, kind: output, shape index: {1}]
  %s10 = inlined_call_operand.hbm [shape: f32[1,10], index: 10, kind: output, shape index: {2}]
  %s11 = inlined_call_operand.hbm [shape: f32[1,10], index: 11, kind: output, shape index: {3}]
  %12 = xla_tuple %s8, %s9, %s10, %s11
  %s13 = sld [smem:[#allocation0]]
  $region74: #{tpu_custom_call.1} parent=0
    _
  %s15 = ssub.s32 1, %s13
  %s16 = scalar_select 0, %s15, %s13
  $region1: #{tpu_custom_call.1} parent=0
    #allocation2 [shape = 'u8[8192]{0}', space=vmem, size = 0x2000, scoped, tag = 'input window, operand 0, single buffered']
    #allocation3 [shape = 's32[1]{0}', space=sflag, size = 0x4, scoped, tag = 'scoped memory for tpu_custom_call.1']
    #allocation4 [shape = 's32[1]{0}', space=sflag, size = 0x4, scoped, tag = 'scoped memory for tpu_custom_call.1']
    #allocation5 [shape = 'u8[8192]{0}', space=vmem, size = 0x2000, scoped, tag = 'input window, operand 1, single buffered']
    #allocation6 [shape = 's32[1]{0}', space=sflag, size = 0x4, scoped, tag = 'scoped memory for tpu_custom_call.1']
    #allocation7 [shape = 'u8[512]{0}', space=vmem, size = 0x400, scoped, tag = 'output window, operand 0, single buffered']
    #allocation8 [shape = 'u8[512]{0}', space=vmem, size = 0x400, scoped, tag = 'output window, operand 1, single buffered']
    #allocation9 [shape = 's32[1]{0}', space=sflag, size = 0x4, scoped, tag = 'scoped memory for tpu_custom_call.1']
    #allocation10 [shape = 'u8[512]{0}', space=vmem, size = 0x400, scoped, tag = 'output window, operand 2, single buffered']
    #allocation11 [shape = 'u8[512]{0}', space=vmem, size = 0x400, scoped, tag = 'output window, operand 3, single buffered']
    #allocation12 [shape = 's32[1]{0}', space=sflag, size = 0x4, scoped, tag = 'scoped memory for tpu_custom_call.1']
    %17 = vsyncpa [#allocation3], 0
    %18 = vsyncpa [#allocation6], 0
    %19 = vsyncpa [#allocation4], 0
    %20 = vsyncpa [#allocation9], 0
    %21 = vsyncpa [#allocation12], 0
    // Predicated region
    $region2: #{tpu_custom_call.1} parent=1 // pred_check
      _
    $region3: #{tpu_custom_call.1} parent=1 // pred_check_branch
      %23 = sbr.rel (0) target = $region5
    $region4: #{tpu_custom_call.1} parent=1 // pred_region
      %s25 = ssub.s32 256, 256
      %26 = vsyncadd [#allocation3], %s25
      %s27 = sshll.u32 [#allocation2], 4
      %s28 = int_to_ptr.vmem [resolvable:$true] %s27
      %33 = dma.hbm_to_vmem [thread:$0]  %s0, 256, %s28, [#allocation3], 128, 128, 8
    $region5: #{tpu_custom_call.1} parent=1 // pred_fallthru
      _
    // Predicated region
    $region6: #{tpu_custom_call.1} parent=1 // pred_check
      _
    $region7: #{tpu_custom_call.1} parent=1 // pred_check_branch
      %35 = sbr.rel (0) target = $region9
    $region8: #{tpu_custom_call.1} parent=1 // pred_region
      %s37 = ssub.s32 256, 256
      %38 = vsyncadd [#allocation6], %s37
      %s39 = sshll.u32 [#allocation5], 4
      %s40 = int_to_ptr.vmem [resolvable:$true] %s39
      %45 = dma.hbm_to_vmem [thread:$0]  %s1, 256, %s40, [#allocation6], 128, 128, 8
    $region9: #{tpu_custom_call.1} parent=1 // pred_fallthru
      _
    // Predicated region
    $region10: #{tpu_custom_call.1} parent=1 // pred_check
      _
    $region11: #{tpu_custom_call.1} parent=1 // pred_check_branch
      %47 = sbr.rel (0) target = $region13
    $region12: #{tpu_custom_call.1} parent=1 // pred_region
      _
    $region13: #{tpu_custom_call.1} parent=1 // pred_fallthru
      _
    // Predicated region
    $region14: #{tpu_custom_call.1} parent=1 // pred_check
      _
    $region15: #{tpu_custom_call.1} parent=1 // pred_check_branch
      %49 = sbr.rel (0) target = $region17
    $region16: #{tpu_custom_call.1} parent=1 // pred_region
      _
    $region17: #{tpu_custom_call.1} parent=1 // pred_fallthru
      _
    // Predicated region
    $region18: #{tpu_custom_call.1} parent=1 // pred_check
      _
    $region19: #{tpu_custom_call.1} parent=1 // pred_check_branch
      %51 = sbr.rel (0) target = $region21
    $region20: #{tpu_custom_call.1} parent=1 // pred_region
      _
    $region21: #{tpu_custom_call.1} parent=1 // pred_fallthru
      _
    // Predicated region
    $region22: #{tpu_custom_call.1} parent=1 // pred_check
      _
    $region23: #{tpu_custom_call.1} parent=1 // pred_check_branch
      %53 = sbr.rel (0) target = $region25
    $region24: #{tpu_custom_call.1} parent=1 // pred_region
      _
    $region25: #{tpu_custom_call.1} parent=1 // pred_fallthru
      _
    // Predicated region
    $region26: #{tpu_custom_call.1} parent=1 // pred_check
      _
    $region27: #{tpu_custom_call.1} parent=1 // pred_check_branch
      %55 = sbr.rel (0) target = $region29
    $region28: #{tpu_custom_call.1} parent=1 // pred_region
      _
    $region29: #{tpu_custom_call.1} parent=1 // pred_fallthru
      _
    // Predicated region
    $region30: #{tpu_custom_call.1} parent=1 // pred_check
      _
    $region31: #{tpu_custom_call.1} parent=1 // pred_check_branch
      %57 = sbr.rel (0) target = $region33
    $region32: #{tpu_custom_call.1} parent=1 // pred_region
      _
    $region33: #{tpu_custom_call.1} parent=1 // pred_fallthru
      _
    // Predicated region
    $region34: #{tpu_custom_call.1} parent=1 // pred_check
      _
    $region35: #{tpu_custom_call.1} parent=1 // pred_check_branch
      %59 = sbr.rel (0) target = $region37
    $region36: #{tpu_custom_call.1} parent=1 // pred_region
      %60 = dma.done [#allocation3], 256
    $region37: #{tpu_custom_call.1} parent=1 // pred_fallthru
      _
    // Predicated region
    $region38: #{tpu_custom_call.1} parent=1 // pred_check
      _
    $region39: #{tpu_custom_call.1} parent=1 // pred_check_branch
      %62 = sbr.rel (0) target = $region41
    $region40: #{tpu_custom_call.1} parent=1 // pred_region
      %63 = dma.done [#allocation6], 256
    $region41: #{tpu_custom_call.1} parent=1 // pred_fallthru
      _
    %v64 = vld [vmem:[#allocation2] sm:$0xff]
    %v65 = vld [vmem:[#allocation2 + $0x8] sm:$0x3]
    %v66 = vld [vmem:[%s6] sm:$0x1]
    %v67 = vld [vmem:[%s2] sm:$0x1]
    %v68 = vld [vmem:[%s4] sm:$0x1]
    %vm69 = vcmask 80896
    %v71 = vsel %vm69, %v66, 0
    %vm73 = vcmask 1041408
    %v75 = vsel %vm73, %v65, 0
    %77 = vmatprep.subr.mxu0 0.0
    %78 = vmatpush1.msra.mxu0 0.0
    %79 = vmatprep.subr.mxu0 0.0
    %80 = vmatpush1.msra.mxu0 0.0
    %81 = vmatprep.subr.mxu0 0.0
    %82 = vmatpush1.msra.mxu0 0.0
    %83 = vmatprep.subr.mxu0 0.0
    %84 = vmatpush1.msra.mxu0 0.0
    %85 = vmatprep.subr.mxu0 0.0
    %86 = vmatpush1.msra.mxu0 0.0
    %87 = vmatprep.subr.mxu0 0.0
    %88 = vmatpush1.msra.mxu0 0.0
    %89 = vmatprep.subr.mxu0 0.0
    %90 = vmatpush1.msra.mxu0 0.0
    %91 = vmatprep.subr.mxu0 0.0
    %92 = vmatpush1.msra.mxu0 0.0
    %93 = vmatprep.subr.mxu0 0.0
    %94 = vmatpush1.msra.mxu0 0.0
    %95 = vmatprep.subr.mxu0 0.0
    %96 = vmatpush1.msra.mxu0 0.0
    %97 = vmatprep.subr.mxu0 0.0
    %98 = vmatpush1.msra.mxu0 0.0
    %99 = vmatprep.subr.mxu0 0.0
    %100 = vmatpush1.msra.mxu0 0.0
    %101 = vmatprep.subr.mxu0 0.0
    %102 = vmatpush1.msra.mxu0 0.0
    %103 = vmatprep.subr.mxu0 0.0
    %104 = vmatpush1.msra.mxu0 0.0
    %105 = vmatprep.subr.mxu0 0.0
    %106 = vmatpush1.msra.mxu0 %v75
    %107 = vmatprep.subr.mxu0 0.0
    %108 = vmatpush1.msra.mxu0 %v64
    %109 = vmatprep.subr.mxu0 0.0
    %110 = vmatpush2.msra.mxu0 0.0
    %111 = vmatprep.subr.mxu0 0.0
    %112 = vmatpush2.msra.mxu0 0.0
    %113 = vmatprep.subr.mxu0 0.0
    %114 = vmatpush2.msra.mxu0 0.0
    %115 = vmatprep.subr.mxu0 0.0
    %116 = vmatpush2.msra.mxu0 0.0
    %117 = vmatprep.subr.mxu0 0.0
    %118 = vmatpush2.msra.mxu0 0.0
    %119 = vmatprep.subr.mxu0 0.0
    %120 = vmatpush2.msra.mxu0 0.0
    %121 = vmatprep.subr.mxu0 0.0
    %122 = vmatpush2.msra.mxu0 0.0
    %123 = vmatprep.subr.mxu0 0.0
    %124 = vmatpush2.msra.mxu0 0.0
    %125 = vmatprep.subr.mxu0 0.0
    %126 = vmatpush2.msra.mxu0 0.0
    %127 = vmatprep.subr.mxu0 0.0
    %128 = vmatpush2.msra.mxu0 0.0
    %129 = vmatprep.subr.mxu0 0.0
    %130 = vmatpush2.msra.mxu0 0.0
    %131 = vmatprep.subr.mxu0 0.0
    %132 = vmatpush2.msra.mxu0 0.0
    %133 = vmatprep.subr.mxu0 0.0
    %134 = vmatpush2.msra.mxu0 0.0
    %135 = vmatprep.subr.mxu0 0.0
    %136 = vmatpush2.msra.mxu0 0.0
    %137 = vmatprep.subr.mxu0 0.0
    %138 = vmatpush2.msra.mxu0 0.0
    %139 = vmatprep.subr.mxu0 0.0
    %140 = vmatpush2.msra.mxu0 0.0
    %141 = vmatprep.mubr.f32.mxu0 0.0
    %142 = vmatmul.mubr.f32.gmra.mxu0 %v71
    %v143 = vpop.f32.mrf.mxu0
    %v144 = vadd.f32 0.0, %v143
    %v145 = vpop.f32.mrf.mxu0
    %146 = vdwg.mxu0
    %v147 = vmul.f32 %v144, -1.0
    %v148 = vrcp.pop 7.0
    %v149 = vmul.f32 %v68, %v148
    %v150 = vsub.f32 %v147, %v149
    %v151 = vadd.f32 %v150, %v67
    %v152 = vmul.f32 %v151, 2.0
    %v153 = vadd.f32 %v68, %v152
    %vm154 = vcmp.lt.f32.partialorder %v153, 1.0
    %v155 = vsel %vm154, 0.14, 1.4
    %v156 = vsub.f32 %v153, 1.0
    %v157 = vrcp.pop %v155
    %v158 = vmul.f32 %v156, %v157
    %v159 = vtanh.pop %v158
    %v160 = vmul.f32 %v155, %v159
    %v161 = vadd.f32 %v160, 0.14
    %v162 = vld [vmem:[#allocation5] sm:$0xff]
    %v163 = vld [vmem:[#allocation5 + $0x8] sm:$0x3]
    %v164 = vld [vmem:[%s7] sm:$0x1]
    %v165 = vld [vmem:[%s3] sm:$0x1]
    %v166 = vld [vmem:[%s5] sm:$0x1]
    %v168 = vsel %vm69, %v164, 0
    %v171 = vsel %vm73, %v163, 0
    %173 = vmatprep.subr.mxu0 0.0
    %174 = vmatpush1.msra.mxu0 0.0
    %175 = vmatprep.subr.mxu0 0.0
    %176 = vmatpush1.msra.mxu0 0.0
    %177 = vmatprep.subr.mxu0 0.0
    %178 = vmatpush1.msra.mxu0 0.0
    %179 = vmatprep.subr.mxu0 0.0
    %180 = vmatpush1.msra.mxu0 0.0
    %181 = vmatprep.subr.mxu0 0.0
    %182 = vmatpush1.msra.mxu0 0.0
    %183 = vmatprep.subr.mxu0 0.0
    %184 = vmatpush1.msra.mxu0 0.0
    %185 = vmatprep.subr.mxu0 0.0
    %186 = vmatpush1.msra.mxu0 0.0
    %187 = vmatprep.subr.mxu0 0.0
    %188 = vmatpush1.msra.mxu0 0.0
    %189 = vmatprep.subr.mxu0 0.0
    %190 = vmatpush1.msra.mxu0 0.0
    %191 = vmatprep.subr.mxu0 0.0
    %192 = vmatpush1.msra.mxu0 0.0
    %193 = vmatprep.subr.mxu0 0.0
    %194 = vmatpush1.msra.mxu0 0.0
    %195 = vmatprep.subr.mxu0 0.0
    %196 = vmatpush1.msra.mxu0 0.0
    %197 = vmatprep.subr.mxu0 0.0
    %198 = vmatpush1.msra.mxu0 0.0
    %199 = vmatprep.subr.mxu0 0.0
    %200 = vmatpush1.msra.mxu0 0.0
    %201 = vmatprep.subr.mxu0 0.0
    %202 = vmatpush1.msra.mxu0 %v171
    %203 = vmatprep.subr.mxu0 0.0
    %204 = vmatpush1.msra.mxu0 %v162
    %205 = vmatprep.subr.mxu0 0.0
    %206 = vmatpush2.msra.mxu0 0.0
    %207 = vmatprep.subr.mxu0 0.0
    %208 = vmatpush2.msra.mxu0 0.0
    %209 = vmatprep.subr.mxu0 0.0
    %210 = vmatpush2.msra.mxu0 0.0
    %211 = vmatprep.subr.mxu0 0.0
    %212 = vmatpush2.msra.mxu0 0.0
    %213 = vmatprep.subr.mxu0 0.0
    %214 = vmatpush2.msra.mxu0 0.0
    %215 = vmatprep.subr.mxu0 0.0
    %216 = vmatpush2.msra.mxu0 0.0
    %217 = vmatprep.subr.mxu0 0.0
    %218 = vmatpush2.msra.mxu0 0.0
    %219 = vmatprep.subr.mxu0 0.0
    %220 = vmatpush2.msra.mxu0 0.0
    %221 = vmatprep.subr.mxu0 0.0
    %222 = vmatpush2.msra.mxu0 0.0
    %223 = vmatprep.subr.mxu0 0.0
    %224 = vmatpush2.msra.mxu0 0.0
    %225 = vmatprep.subr.mxu0 0.0
    %226 = vmatpush2.msra.mxu0 0.0
    %227 = vmatprep.subr.mxu0 0.0
    %228 = vmatpush2.msra.mxu0 0.0
    %229 = vmatprep.subr.mxu0 0.0
    %230 = vmatpush2.msra.mxu0 0.0
    %231 = vmatprep.subr.mxu0 0.0
    %232 = vmatpush2.msra.mxu0 0.0
    %233 = vmatprep.subr.mxu0 0.0
    %234 = vmatpush2.msra.mxu0 0.0
    %235 = vmatprep.subr.mxu0 0.0
    %236 = vmatpush2.msra.mxu0 0.0
    %237 = vmatprep.mubr.f32.mxu0 0.0
    %238 = vmatmul.mubr.f32.gmra.mxu0 %v168
    %v239 = vpop.f32.mrf.mxu0
    %v240 = vadd.f32 0.0, %v239
    %v241 = vpop.f32.mrf.mxu0
    %242 = vdwg.mxu0
    %v243 = vmul.f32 %v166, %v148
    %v244 = vsub.f32 %v240, %v243
    %v245 = vadd.f32 %v244, %v165
    %v246 = vmul.f32 %v245, 2.0
    %v247 = vadd.f32 %v166, %v246
    %vm248 = vcmp.lt.f32.partialorder %v247, 1.0
    %v249 = vsel %vm248, 0.29, 2.9
    %v250 = vsub.f32 %v247, 1.0
    %v251 = vrcp.pop %v249
    %v252 = vmul.f32 %v250, %v251
    %v253 = vtanh.pop %v252
    %v254 = vmul.f32 %v249, %v253
    %v255 = vadd.f32 %v254, 0.29
    %vm256 = vcmask 73728
    %257 = vst.msk [vmem:[#allocation7] sm:$0x1] %vm256, %v153
    %258 = vst.msk [vmem:[#allocation8] sm:$0x1] %vm256, %v161
    %259 = vst.msk [vmem:[#allocation10] sm:$0x1] %vm256, %v247
    %260 = vst.msk [vmem:[#allocation11] sm:$0x1] %vm256, %v255
    // Predicated region
    $region42: #{tpu_custom_call.1} parent=1 // pred_check
      _
    $region43: #{tpu_custom_call.1} parent=1 // pred_check_branch
      %262 = sbr.rel (0) target = $region45
    $region44: #{tpu_custom_call.1} parent=1 // pred_region
      %s264 = ssub.s32 16, 16
      %265 = vsyncadd [#allocation4], %s264
      %s267 = sshll.u32 [#allocation7], 4
      %s268 = int_to_ptr.vmem [resolvable:$true] %s267
      %270 = dma.vmem_to_hbm [thread:$0]  %s268, 16, %s8, [#allocation4]
    $region45: #{tpu_custom_call.1} parent=1 // pred_fallthru
      _
    // Predicated region
    $region46: #{tpu_custom_call.1} parent=1 // pred_check
      _
    $region47: #{tpu_custom_call.1} parent=1 // pred_check_branch
      %272 = sbr.rel (0) target = $region49
    $region48: #{tpu_custom_call.1} parent=1 // pred_region
      %s274 = ssub.s32 16, 16
      %275 = vsyncadd [#allocation9], %s274
      %s277 = sshll.u32 [#allocation8], 4
      %s278 = int_to_ptr.vmem [resolvable:$true] %s277
      %280 = dma.vmem_to_hbm [thread:$0]  %s278, 16, %s9, [#allocation9]
    $region49: #{tpu_custom_call.1} parent=1 // pred_fallthru
      _
    // Predicated region
    $region50: #{tpu_custom_call.1} parent=1 // pred_check
      _
    $region51: #{tpu_custom_call.1} parent=1 // pred_check_branch
      %282 = sbr.rel (0) target = $region53
    $region52: #{tpu_custom_call.1} parent=1 // pred_region
      %s284 = ssub.s32 16, 16
      %285 = vsyncadd [#allocation9], %s284
      %s287 = sshll.u32 [#allocation10], 4
      %s288 = int_to_ptr.vmem [resolvable:$true] %s287
      %290 = dma.vmem_to_hbm [thread:$0]  %s288, 16, %s10, [#allocation9]
    $region53: #{tpu_custom_call.1} parent=1 // pred_fallthru
      _
    // Predicated region
    $region54: #{tpu_custom_call.1} parent=1 // pred_check
      _
    $region55: #{tpu_custom_call.1} parent=1 // pred_check_branch
      %292 = sbr.rel (0) target = $region57
    $region56: #{tpu_custom_call.1} parent=1 // pred_region
      %s294 = ssub.s32 16, 16
      %295 = vsyncadd [#allocation12], %s294
      %s297 = sshll.u32 [#allocation11], 4
      %s298 = int_to_ptr.vmem [resolvable:$true] %s297
      %300 = dma.vmem_to_hbm [thread:$0]  %s298, 16, %s11, [#allocation12]
    $region57: #{tpu_custom_call.1} parent=1 // pred_fallthru
      _
    // Predicated region
    $region58: #{tpu_custom_call.1} parent=1 // pred_check
      _
    $region59: #{tpu_custom_call.1} parent=1 // pred_check_branch
      %302 = sbr.rel (0) target = $region61
    $region60: #{tpu_custom_call.1} parent=1 // pred_region
      %303 = dma.done [#allocation4], 16
    $region61: #{tpu_custom_call.1} parent=1 // pred_fallthru
      _
    // Predicated region
    $region62: #{tpu_custom_call.1} parent=1 // pred_check
      _
    $region63: #{tpu_custom_call.1} parent=1 // pred_check_branch
      %305 = sbr.rel (0) target = $region65
    $region64: #{tpu_custom_call.1} parent=1 // pred_region
      %306 = dma.done [#allocation9], 16
    $region65: #{tpu_custom_call.1} parent=1 // pred_fallthru
      _
    // Predicated region
    $region66: #{tpu_custom_call.1} parent=1 // pred_check
      _
    $region67: #{tpu_custom_call.1} parent=1 // pred_check_branch
      %308 = sbr.rel (0) target = $region69
    $region68: #{tpu_custom_call.1} parent=1 // pred_region
      %309 = dma.done [#allocation9], 16
    $region69: #{tpu_custom_call.1} parent=1 // pred_fallthru
      _
    // Predicated region
    $region70: #{tpu_custom_call.1} parent=1 // pred_check
      _
    $region71: #{tpu_custom_call.1} parent=1 // pred_check_branch
      %311 = sbr.rel (0) target = $region73
    $region72: #{tpu_custom_call.1} parent=1 // pred_region
      %312 = dma.done [#allocation12], 16
    $region73: #{tpu_custom_call.1} parent=1 // pred_fallthru
      _
    %313 = vsyncpa [#allocation3], 1
    %314 = vsyncpa [#allocation6], 1
    %315 = vsyncpa [#allocation4], 1
    %316 = vsyncpa [#allocation9], 1
    %317 = vsyncpa [#allocation12], 1

</llo_original>
